<compile_context>
chip_gen: v5e
topology: v5e:2x2
jax: 0.10.0
libtpu: 0.0.40
codegen_flags: <defaults>
</compile_context>

<pallas_src>
import jax
import jax.numpy as jnp
from jax.experimental import pallas as pl
from jax.experimental.pallas import tpu as pltpu


def _round_up(n, m):
    return ((n + m - 1) // m) * m


def _autoencoder_kernel(x_ref,
                        w1_ref, b1_ref,
                        w2_ref, b2_ref,
                        w3_ref, b3_ref,
                        w4_ref, b4_ref,
                        emb_ref, rec_ref):
    cd = w1_ref.dtype  # compute (MXU operand) dtype, e.g. bf16
    x = x_ref[...]

    # ----- encoder: Linear -> ReLU -> Dropout(id) -> Linear -----
    h0 = jnp.dot(x, w1_ref[...], preferred_element_type=jnp.float32) + b1_ref[...]
    h0 = jnp.maximum(h0, 0.0)
    # TODO(synk): Dropout(0.1) is identity here (eval mode); training-mode stochastic
    # masking would use pltpu.prng_seed + pltpu.prng_random_bits.
    emb = jnp.dot(h0.astype(cd), w2_ref[...],
                  preferred_element_type=jnp.float32) + b2_ref[...]
    emb_ref[...] = emb.astype(emb_ref.dtype)

    # ----- decoder: Linear -> Dropout(id) -> ReLU -> Linear -----
    d0 = jnp.dot(emb.astype(cd), w3_ref[...],
                 preferred_element_type=jnp.float32) + b3_ref[...]
    d0 = jnp.maximum(d0, 0.0)
    rec = jnp.dot(d0.astype(cd), w4_ref[...],
                  preferred_element_type=jnp.float32) + b4_ref[...]
    rec_ref[...] = rec.astype(rec_ref.dtype)


def autoencoder_forward(x, params, *, block_b=None,
                        compute_dtype=jnp.bfloat16,
                        vmem_limit_bytes=None):
    """Runs encoder+decoder. Returns (embedding, reconstructed), both float32."""
    (w1, b1), (w2, b2), (w3, b3), (w4, b4) = params
    B, D = x.shape
    H0 = w1.shape[1]
    H1 = w2.shape[1]

    # Lane-dense feature padding (multiples of 128) for the streamed arrays.
    Dp = _round_up(D, 128)
    H1p = _round_up(H1, 128)

    # Fixed batch tile: many grid steps for DMA/compute pipelining + megacore split.
    if block_b is None:
        block_b = min(512, _round_up(B, 8))
    block_b = max(8, _round_up(block_b, 8))
    Bp = _round_up(B, block_b)
    grid = (Bp // block_b,)

    cd = compute_dtype
    f32 = jnp.float32
    # Zero-padding is exact: padded K-rows/N-cols contribute exactly 0 to the output.
    x_p = jnp.zeros((Bp, Dp), cd).at[:B, :D].set(x.astype(cd))
    w1_p = jnp.zeros((Dp, H0), cd).at[:D, :].set(w1.astype(cd))
    w2_p = jnp.zeros((H0, H1p), cd).at[:, :H1].set(w2.astype(cd))
    w3_p = jnp.zeros((H1p, H0), cd).at[:H1, :].set(w3.astype(cd))
    w4_p = jnp.zeros((H0, Dp), cd).at[:, :D].set(w4.astype(cd))
    b1_p = b1.astype(f32)
    b2_p = jnp.zeros((1, H1p), f32).at[:, :H1].set(b2.astype(f32))
    b3_p = b3.astype(f32)
    b4_p = jnp.zeros((1, Dp), f32).at[:, :D].set(b4.astype(f32))

    # Weights/biases are replicated to every grid step (constant block index).
    # They are tiny (~100 KiB total) so double-buffering them is negligible VMEM.
    def rep(arr):
        shape = arr.shape
        return pl.BlockSpec(shape, lambda i: (0,) * len(shape))

    in_specs = [
        pl.BlockSpec((block_b, Dp), lambda i: (i, 0)),   # x (batch-tiled)
        rep(w1_p), rep(b1_p),
        rep(w2_p), rep(b2_p),
        rep(w3_p), rep(b3_p),
        rep(w4_p), rep(b4_p),
    ]
    out_specs = [
        pl.BlockSpec((block_b, H1p), lambda i: (i, 0)),  # embedding (lane-dense)
        pl.BlockSpec((block_b, Dp), lambda i: (i, 0)),   # reconstruction (lane-dense)
    ]
    out_shape = [
        jax.ShapeDtypeStruct((Bp, H1p), f32),
        jax.ShapeDtypeStruct((Bp, Dp), f32),
    ]

    weight_bytes = sum(int(a.size) * a.dtype.itemsize
                       for a in (w1_p, b1_p, w2_p, b2_p, w3_p, b3_p, w4_p, b4_p))
    cost = pl.CostEstimate(
        flops=2 * Bp * (Dp * H0 + H0 * H1p + H1p * H0 + H0 * Dp),
        transcendentals=0,
        bytes_accessed=int(x_p.size) * x_p.dtype.itemsize
                       + weight_bytes
                       + Bp * H1p * 4 + Bp * Dp * 4,
    )

    emb_p, rec_p = pl.pallas_call(
        _autoencoder_kernel,
        grid=grid,
        in_specs=in_specs,
        out_specs=out_specs,
        out_shape=out_shape,
        cost_estimate=cost,
        compiler_params=pltpu.CompilerParams(
            dimension_semantics=("parallel",),
            vmem_limit_bytes=vmem_limit_bytes),
    )(x_p, w1_p, b1_p, w2_p, b2_p, w3_p, b3_p, w4_p, b4_p)

    return emb_p[:B, :H1], rec_p[:B, :D]


def init_params(key, input_dim, hidden_dims):
    """Deterministic init mimicking PyTorch nn.Linear default (U(-1/sqrt(fan_in), +)).
    Weights are stored (in_features, out_features)."""
    dims = [(input_dim, hidden_dims[0]),
            (hidden_dims[0], hidden_dims[1]),
            (hidden_dims[1], hidden_dims[0]),
            (hidden_dims[0], input_dim)]
    params = []
    for (fan_in, fan_out) in dims:
        key, kw, kb = jax.random.split(key, 3)
        bound = 1.0 / (fan_in ** 0.5)
        w = jax.random.uniform(kw, (fan_in, fan_out), jnp.float32, -bound, bound)
        b = jax.random.uniform(kb, (1, fan_out), jnp.float32, -bound, bound)
        params.append((w, b))
    return params


def reference_forward(x, params, compute_dtype=jnp.bfloat16):
    """Pure-JAX reference with the same bf16-operand / f32-accumulate numerics."""
    (w1, b1), (w2, b2), (w3, b3), (w4, b4) = params
    cd = compute_dtype

    def lin(a, w, b):
        return jnp.dot(a.astype(cd), w.astype(cd),
                       preferred_element_type=jnp.float32) + b.astype(jnp.float32)

    h = jnp.maximum(lin(x, w1, b1), 0.0)
    emb = lin(h, w2, b2)
    d = jnp.maximum(lin(emb, w3, b3), 0.0)
    rec = lin(d, w4, b4)
    return emb, rec


if __name__ == "__main__":
    # Small shapes implied by the module: x is (batch, input_dim) for an MLP autoencoder.
    batch = 200           # deliberately not a multiple of the tile -> exercises padding
    input_dim = 128
    hidden_dims = [64, 32]

    key = jax.random.PRNGKey(0)
    key, kx = jax.random.split(key)
    x = jax.random.normal(kx, (batch, input_dim), jnp.float32)
    params = init_params(key, input_dim, hidden_dims)

    emb_ref, rec_ref = reference_forward(x, params)

    # (1) default tiling path
    emb, rec = autoencoder_forward(x, params)
    jax.block_until_ready((emb, rec))
    assert emb.shape == (batch, hidden_dims[1])
    assert rec.shape == (batch, input_dim)
    assert jnp.allclose(emb, emb_ref, atol=2e-3, rtol=2e-3)
    assert jnp.allclose(rec, rec_ref, atol=2e-3, rtol=2e-3)

    # (2) explicit small tile -> multi-step grid (pipelined + padded final tile)
    emb2, rec2 = autoencoder_forward(x, params, block_b=64)
    jax.block_until_ready((emb2, rec2))
    assert jnp.allclose(emb2, emb_ref, atol=2e-3, rtol=2e-3)
    assert jnp.allclose(rec2, rec_ref, atol=2e-3, rtol=2e-3)

    print("KERNEL_OK")
</pallas_src>

<mosaic_0001>
module attributes {stable_mosaic.version = 11 : i64} {
  func.func @_autoencoder_kernel(%arg0: i32, %arg1: memref<200x128xbf16, #tpu.memory_space<vmem>>, %arg2: memref<128x64xbf16, #tpu.memory_space<vmem>>, %arg3: memref<1x64xf32, #tpu.memory_space<vmem>>, %arg4: memref<64x128xbf16, #tpu.memory_space<vmem>>, %arg5: memref<1x128xf32, #tpu.memory_space<vmem>>, %arg6: memref<128x64xbf16, #tpu.memory_space<vmem>>, %arg7: memref<1x64xf32, #tpu.memory_space<vmem>>, %arg8: memref<64x128xbf16, #tpu.memory_space<vmem>>, %arg9: memref<1x128xf32, #tpu.memory_space<vmem>>, %arg10: memref<200x128xf32, #tpu.memory_space<vmem>>, %arg11: memref<200x128xf32, #tpu.memory_space<vmem>>) attributes {dimension_semantics = [#tpu.dimension_semantics<parallel>], iteration_bounds = array<i64: 1>, scalar_prefetch = 0 : i64, scratch_operands = 0 : i64, tpu.core_type = #tpu.core_type<tc>, window_params = [{transform_indices = @transform_0, window_bounds = array<i64: 200, 128>}, {pipeline_mode = #tpu.pipeline_mode<synchronous>, transform_indices = @transform_1, window_bounds = array<i64: 128, 64>}, {pipeline_mode = #tpu.pipeline_mode<synchronous>, transform_indices = @transform_2, window_bounds = array<i64: 1, 64>}, {pipeline_mode = #tpu.pipeline_mode<synchronous>, transform_indices = @transform_3, window_bounds = array<i64: 64, 128>}, {pipeline_mode = #tpu.pipeline_mode<synchronous>, transform_indices = @transform_4, window_bounds = array<i64: 1, 128>}, {pipeline_mode = #tpu.pipeline_mode<synchronous>, transform_indices = @transform_5, window_bounds = array<i64: 128, 64>}, {pipeline_mode = #tpu.pipeline_mode<synchronous>, transform_indices = @transform_6, window_bounds = array<i64: 1, 64>}, {pipeline_mode = #tpu.pipeline_mode<synchronous>, transform_indices = @transform_7, window_bounds = array<i64: 64, 128>}, {pipeline_mode = #tpu.pipeline_mode<synchronous>, transform_indices = @transform_8, window_bounds = array<i64: 1, 128>}, {transform_indices = @transform_9, window_bounds = array<i64: 200, 128>}, {transform_indices = @transform_10, window_bounds = array<i64: 200, 128>}]} {
    %c0 = arith.constant 0 : index
    %c0_0 = arith.constant 0 : index
    %0 = vector.load %arg1[%c0, %c0_0] : memref<200x128xbf16, #tpu.memory_space<vmem>>, vector<200x128xbf16>
    %c0_1 = arith.constant 0 : index
    %c0_2 = arith.constant 0 : index
    %1 = vector.load %arg2[%c0_1, %c0_2] : memref<128x64xbf16, #tpu.memory_space<vmem>>, vector<128x64xbf16>
    %cst = arith.constant dense<0.000000e+00> : vector<200x64xf32>
    %2 = tpu.matmul %0, %1, %cst {dimension_numbers = #tpu.dot_dimension_numbers<[1], [0], [0], [1], [0, 0, 1, 1], [], []>} : vector<200x128xbf16>, vector<128x64xbf16>, vector<200x64xf32> -> vector<200x64xf32>
    %c0_3 = arith.constant 0 : index
    %c0_4 = arith.constant 0 : index
    %3 = vector.load %arg3[%c0_3, %c0_4] : memref<1x64xf32, #tpu.memory_space<vmem>>, vector<1x64xf32>
    %4 = vector.broadcast %3 : vector<1x64xf32> to vector<200x64xf32>
    %5 = arith.addf %2, %4 : vector<200x64xf32>
    %cst_5 = arith.constant 0.000000e+00 : f32
    %6 = vector.broadcast %cst_5 : f32 to vector<200x64xf32>
    %7 = arith.maximumf %5, %6 : vector<200x64xf32>
    %8 = arith.truncf %7 : vector<200x64xf32> to vector<200x64xbf16>
    %c0_6 = arith.constant 0 : index
    %c0_7 = arith.constant 0 : index
    %9 = vector.load %arg4[%c0_6, %c0_7] : memref<64x128xbf16, #tpu.memory_space<vmem>>, vector<64x128xbf16>
    %cst_8 = arith.constant dense<0.000000e+00> : vector<200x128xf32>
    %10 = tpu.matmul %8, %9, %cst_8 {dimension_numbers = #tpu.dot_dimension_numbers<[1], [0], [0], [1], [0, 0, 1, 1], [], []>} : vector<200x64xbf16>, vector<64x128xbf16>, vector<200x128xf32> -> vector<200x128xf32>
    %c0_9 = arith.constant 0 : index
    %c0_10 = arith.constant 0 : index
    %11 = vector.load %arg5[%c0_9, %c0_10] : memref<1x128xf32, #tpu.memory_space<vmem>>, vector<1x128xf32>
    %12 = vector.broadcast %11 : vector<1x128xf32> to vector<200x128xf32>
    %13 = arith.addf %10, %12 : vector<200x128xf32>
    %c0_11 = arith.constant 0 : index
    %c0_12 = arith.constant 0 : index
    %14 = vector.load %arg10[%c0_11, %c0_12] : memref<200x128xf32, #tpu.memory_space<vmem>>, vector<200x128xf32>
    tpu.vector_store %arg10[%c0_11, %c0_12], %13 {strides = array<i32>} : memref<200x128xf32, #tpu.memory_space<vmem>>, vector<200x128xf32>,
    %15 = arith.truncf %13 : vector<200x128xf32> to vector<200x128xbf16>
    %c0_13 = arith.constant 0 : index
    %c0_14 = arith.constant 0 : index
    %16 = vector.load %arg6[%c0_13, %c0_14] : memref<128x64xbf16, #tpu.memory_space<vmem>>, vector<128x64xbf16>
    %cst_15 = arith.constant dense<0.000000e+00> : vector<200x64xf32>
    %17 = tpu.matmul %15, %16, %cst_15 {dimension_numbers = #tpu.dot_dimension_numbers<[1], [0], [0], [1], [0, 0, 1, 1], [], []>} : vector<200x128xbf16>, vector<128x64xbf16>, vector<200x64xf32> -> vector<200x64xf32>
    %c0_16 = arith.constant 0 : index
    %c0_17 = arith.constant 0 : index
    %18 = vector.load %arg7[%c0_16, %c0_17] : memref<1x64xf32, #tpu.memory_space<vmem>>, vector<1x64xf32>
    %19 = vector.broadcast %18 : vector<1x64xf32> to vector<200x64xf32>
    %20 = arith.addf %17, %19 : vector<200x64xf32>
    %cst_18 = arith.constant 0.000000e+00 : f32
    %21 = vector.broadcast %cst_18 : f32 to vector<200x64xf32>
    %22 = arith.maximumf %20, %21 : vector<200x64xf32>
    %23 = arith.truncf %22 : vector<200x64xf32> to vector<200x64xbf16>
    %c0_19 = arith.constant 0 : index
    %c0_20 = arith.constant 0 : index
    %24 = vector.load %arg8[%c0_19, %c0_20] : memref<64x128xbf16, #tpu.memory_space<vmem>>, vector<64x128xbf16>
    %cst_21 = arith.constant dense<0.000000e+00> : vector<200x128xf32>
    %25 = tpu.matmul %23, %24, %cst_21 {dimension_numbers = #tpu.dot_dimension_numbers<[1], [0], [0], [1], [0, 0, 1, 1], [], []>} : vector<200x64xbf16>, vector<64x128xbf16>, vector<200x128xf32> -> vector<200x128xf32>
    %c0_22 = arith.constant 0 : index
    %c0_23 = arith.constant 0 : index
    %26 = vector.load %arg9[%c0_22, %c0_23] : memref<1x128xf32, #tpu.memory_space<vmem>>, vector<1x128xf32>
    %27 = vector.broadcast %26 : vector<1x128xf32> to vector<200x128xf32>
    %28 = arith.addf %25, %27 : vector<200x128xf32>
    %c0_24 = arith.constant 0 : index
    %c0_25 = arith.constant 0 : index
    %29 = vector.load %arg11[%c0_24, %c0_25] : memref<200x128xf32, #tpu.memory_space<vmem>>, vector<200x128xf32>
    tpu.vector_store %arg11[%c0_24, %c0_25], %28 {strides = array<i32>} : memref<200x128xf32, #tpu.memory_space<vmem>>, vector<200x128xf32>,
    return
  }
  func.func @transform_0(%arg0: i32) -> (i32, i32) {
    %c0_i32 = arith.constant 0 : i32
    %c0_i32_0 = arith.constant 0 : i32
    return %arg0, %c0_i32 : i32, i32
  }
  func.func @transform_1(%arg0: i32) -> (i32, i32) {
    %c0_i32 = arith.constant 0 : i32
    %c0_i32_0 = arith.constant 0 : i32
    %c0_i32_1 = arith.constant 0 : i32
    return %c0_i32, %c0_i32_0 : i32, i32
  }
  func.func @transform_2(%arg0: i32) -> (i32, i32) {
    %c0_i32 = arith.constant 0 : i32
    %c0_i32_0 = arith.constant 0 : i32
    %c0_i32_1 = arith.constant 0 : i32
    return %c0_i32, %c0_i32_0 : i32, i32
  }
  func.func @transform_3(%arg0: i32) -> (i32, i32) {
    %c0_i32 = arith.constant 0 : i32
    %c0_i32_0 = arith.constant 0 : i32
    %c0_i32_1 = arith.constant 0 : i32
    return %c0_i32, %c0_i32_0 : i32, i32
  }
  func.func @transform_4(%arg0: i32) -> (i32, i32) {
    %c0_i32 = arith.constant 0 : i32
    %c0_i32_0 = arith.constant 0 : i32
    %c0_i32_1 = arith.constant 0 : i32
    return %c0_i32, %c0_i32_0 : i32, i32
  }
  func.func @transform_5(%arg0: i32) -> (i32, i32) {
    %c0_i32 = arith.constant 0 : i32
    %c0_i32_0 = arith.constant 0 : i32
    %c0_i32_1 = arith.constant 0 : i32
    return %c0_i32, %c0_i32_0 : i32, i32
  }
  func.func @transform_6(%arg0: i32) -> (i32, i32) {
    %c0_i32 = arith.constant 0 : i32
    %c0_i32_0 = arith.constant 0 : i32
    %c0_i32_1 = arith.constant 0 : i32
    return %c0_i32, %c0_i32_0 : i32, i32
  }
  func.func @transform_7(%arg0: i32) -> (i32, i32) {
    %c0_i32 = arith.constant 0 : i32
    %c0_i32_0 = arith.constant 0 : i32
    %c0_i32_1 = arith.constant 0 : i32
    return %c0_i32, %c0_i32_0 : i32, i32
  }
  func.func @transform_8(%arg0: i32) -> (i32, i32) {
    %c0_i32 = arith.constant 0 : i32
    %c0_i32_0 = arith.constant 0 : i32
    %c0_i32_1 = arith.constant 0 : i32
    return %c0_i32, %c0_i32_0 : i32, i32
  }
  func.func @transform_9(%arg0: i32) -> (i32, i32) {
    %c0_i32 = arith.constant 0 : i32
    %c0_i32_0 = arith.constant 0 : i32
    return %arg0, %c0_i32 : i32, i32
  }
  func.func @transform_10(%arg0: i32) -> (i32, i32) {
    %c0_i32 = arith.constant 0 : i32
    %c0_i32_0 = arith.constant 0 : i32
    return %arg0, %c0_i32 : i32, i32
  }
}

</mosaic_0001>

<llo_original>
// kernel: tpu_custom_call.1
$region0: #{tpu_custom_call.1}
  #allocation0 [shape = 'u32[]', space=smem, size = 0x4, offset = 0x4, fixed_abs, tag = 'smem constant byte address 0x4 - core index']
  #allocation1 [shape = 'u32[72,128]{1,0:T(1,128)}', space=vmem, size = 0x9000, scoped, tag = 'internal scratch']
  %s0 = inlined_call_operand.vmem [shape: bf16[200,128], index: 0, kind: input, shape index: {}]
  %s1 = inlined_call_operand.vmem [shape: bf16[128,64], index: 1, kind: input, shape index: {}]
  %s2 = inlined_call_operand.vmem [shape: f32[1,64], index: 2, kind: input, shape index: {}]
  %s3 = inlined_call_operand.vmem [shape: bf16[64,128], index: 3, kind: input, shape index: {}]
  %s4 = inlined_call_operand.vmem [shape: f32[1,128], index: 4, kind: input, shape index: {}]
  %s5 = inlined_call_operand.vmem [shape: bf16[128,64], index: 5, kind: input, shape index: {}]
  %s6 = inlined_call_operand.vmem [shape: f32[1,64], index: 6, kind: input, shape index: {}]
  %s7 = inlined_call_operand.vmem [shape: bf16[64,128], index: 7, kind: input, shape index: {}]
  %s8 = inlined_call_operand.vmem [shape: f32[1,128], index: 8, kind: input, shape index: {}]
  %s9 = inlined_call_operand.hbm [shape: f32[200,128], index: 9, kind: output, shape index: {0}]
  %s10 = inlined_call_operand.hbm [shape: f32[200,128], index: 10, kind: output, shape index: {1}]
  %11 = xla_tuple %s9, %s10
  %s12 = sld [smem:[#allocation0]]
  $region54: #{tpu_custom_call.1} parent=0
    _
  %s14 = ssub.s32 1, %s12
  %s15 = scalar_select 0, %s14, %s12
  $region1: #{tpu_custom_call.1} parent=0
    #allocation2 [shape = 'u8[102400]{0}', space=vmem, size = 0x19000, scoped, tag = 'output window, operand 0, single buffered']
    #allocation3 [shape = 's32[1]{0}', space=sflag, size = 0x4, scoped, tag = 'scoped memory for tpu_custom_call.1']
    #allocation4 [shape = 'u8[102400]{0}', space=vmem, size = 0x19000, scoped, tag = 'output window, operand 1, single buffered']
    #allocation5 [shape = 's32[1]{0}', space=sflag, size = 0x4, scoped, tag = 'scoped memory for tpu_custom_call.1']
    %16 = vsyncpa [#allocation3], 0
    %17 = vsyncpa [#allocation5], 0
    // Predicated region
    $region2: #{tpu_custom_call.1} parent=1 // pred_check
      _
    $region3: #{tpu_custom_call.1} parent=1 // pred_check_branch
      %19 = sbr.rel (0) target = $region5
    $region4: #{tpu_custom_call.1} parent=1 // pred_region
      _
    $region5: #{tpu_custom_call.1} parent=1 // pred_fallthru
      _
    // Predicated region
    $region6: #{tpu_custom_call.1} parent=1 // pred_check
      _
    $region7: #{tpu_custom_call.1} parent=1 // pred_check_branch
      %21 = sbr.rel (0) target = $region9
    $region8: #{tpu_custom_call.1} parent=1 // pred_region
      _
    $region9: #{tpu_custom_call.1} parent=1 // pred_fallthru
      _
    // Predicated region
    $region10: #{tpu_custom_call.1} parent=1 // pred_check
      _
    $region11: #{tpu_custom_call.1} parent=1 // pred_check_branch
      %23 = sbr.rel (0) target = $region13
    $region12: #{tpu_custom_call.1} parent=1 // pred_region
      _
    $region13: #{tpu_custom_call.1} parent=1 // pred_fallthru
      _
    // Predicated region
    $region14: #{tpu_custom_call.1} parent=1 // pred_check
      _
    $region15: #{tpu_custom_call.1} parent=1 // pred_check_branch
      %25 = sbr.rel (0) target = $region17
    $region16: #{tpu_custom_call.1} parent=1 // pred_region
      _
    $region17: #{tpu_custom_call.1} parent=1 // pred_fallthru
      _
    // Predicated region
    $region18: #{tpu_custom_call.1} parent=1 // pred_check
      _
    $region19: #{tpu_custom_call.1} parent=1 // pred_check_branch
      %27 = sbr.rel (0) target = $region21
    $region20: #{tpu_custom_call.1} parent=1 // pred_region
      _
    $region21: #{tpu_custom_call.1} parent=1 // pred_fallthru
      _
    // Predicated region
    $region22: #{tpu_custom_call.1} parent=1 // pred_check
      _
    $region23: #{tpu_custom_call.1} parent=1 // pred_check_branch
      %29 = sbr.rel (0) target = $region25
    $region24: #{tpu_custom_call.1} parent=1 // pred_region
      _
    $region25: #{tpu_custom_call.1} parent=1 // pred_fallthru
      _
    // Predicated region
    $region26: #{tpu_custom_call.1} parent=1 // pred_check
      _
    $region27: #{tpu_custom_call.1} parent=1 // pred_check_branch
      %31 = sbr.rel (0) target = $region29
    $region28: #{tpu_custom_call.1} parent=1 // pred_region
      _
    $region29: #{tpu_custom_call.1} parent=1 // pred_fallthru
      _
    // Predicated region
    $region30: #{tpu_custom_call.1} parent=1 // pred_check
      _
    $region31: #{tpu_custom_call.1} parent=1 // pred_check_branch
      %33 = sbr.rel (0) target = $region33
    $region32: #{tpu_custom_call.1} parent=1 // pred_region
      _
    $region33: #{tpu_custom_call.1} parent=1 // pred_fallthru
      _
    // Predicated region
    $region34: #{tpu_custom_call.1} parent=1 // pred_check
      _
    $region35: #{tpu_custom_call.1} parent=1 // pred_check_branch
      %35 = sbr.rel (0) target = $region37
    $region36: #{tpu_custom_call.1} parent=1 // pred_region
      _
    $region37: #{tpu_custom_call.1} parent=1 // pred_fallthru
      _
    %v37 = vld [vmem:[%s0] sm:$0xf]
    %v38 = vld [vmem:[%s0 + $0x4] sm:$0xf]
    %v39 = vld [vmem:[%s0 + $0x8] sm:$0xf]
    %v40 = vld [vmem:[%s0 + $0xc] sm:$0xf]
    %v41 = vld [vmem:[%s0 + $0x10] sm:$0xf]
    %v42 = vld [vmem:[%s0 + $0x14] sm:$0xf]
    %v43 = vld [vmem:[%s0 + $0x18] sm:$0xf]
    %v44 = vld [vmem:[%s0 + $0x1c] sm:$0xf]
    %v45 = vld [vmem:[%s0 + $0x20] sm:$0xf]
    %v46 = vld [vmem:[%s0 + $0x24] sm:$0xf]
    %v47 = vld [vmem:[%s0 + $0x28] sm:$0xf]
    %v48 = vld [vmem:[%s0 + $0x2c] sm:$0xf]
    %v49 = vld [vmem:[%s0 + $0x30] sm:$0xf]
    %v50 = vld [vmem:[%s0 + $0x34] sm:$0xf]
    %v51 = vld [vmem:[%s0 + $0x38] sm:$0xf]
    %v52 = vld [vmem:[%s0 + $0x3c] sm:$0xf]
    %v53 = vld [vmem:[%s0 + $0x40] sm:$0xf]
    %v54 = vld [vmem:[%s0 + $0x44] sm:$0xf]
    %v55 = vld [vmem:[%s0 + $0x48] sm:$0xf]
    %v56 = vld [vmem:[%s0 + $0x4c] sm:$0xf]
    %v57 = vld [vmem:[%s0 + $0x50] sm:$0xf]
    %v58 = vld [vmem:[%s0 + $0x54] sm:$0xf]
    %v59 = vld [vmem:[%s0 + $0x58] sm:$0xf]
    %v60 = vld [vmem:[%s0 + $0x5c] sm:$0xf]
    %v61 = vld [vmem:[%s0 + $0x60] sm:$0xf]
    %v62 = vld [vmem:[%s1] sm:$0xf]
    %v63 = vld [vmem:[%s1 + $0x4] sm:$0xf]
    %v64 = vld [vmem:[%s1 + $0x8] sm:$0xf]
    %v65 = vld [vmem:[%s1 + $0xc] sm:$0xf]
    %v66 = vld [vmem:[%s1 + $0x10] sm:$0xf]
    %v67 = vld [vmem:[%s1 + $0x14] sm:$0xf]
    %v68 = vld [vmem:[%s1 + $0x18] sm:$0xf]
    %v69 = vld [vmem:[%s1 + $0x1c] sm:$0xf]
    %v70 = vld [vmem:[%s1 + $0x20] sm:$0xf]
    %v71 = vld [vmem:[%s1 + $0x24] sm:$0xf]
    %v72 = vld [vmem:[%s1 + $0x28] sm:$0xf]
    %v73 = vld [vmem:[%s1 + $0x2c] sm:$0xf]
    %v74 = vld [vmem:[%s1 + $0x30] sm:$0xf]
    %v75 = vld [vmem:[%s1 + $0x34] sm:$0xf]
    %v76 = vld [vmem:[%s1 + $0x38] sm:$0xf]
    %v77 = vld [vmem:[%s1 + $0x3c] sm:$0xf]
    %v78 = vld [vmem:[%s2] sm:$0x1]
    %v80 = vperm.slane %v78, 0
    %v107 = vunpack.c.l.b16 %v37
    %v108 = vunpack.c.l.b16 %v38
    %v109 = vunpack.c.l.b16 %v39
    %v110 = vunpack.c.l.b16 %v40
    %v111 = vunpack.c.l.b16 %v41
    %v112 = vunpack.c.l.b16 %v42
    %v113 = vunpack.c.l.b16 %v43
    %v114 = vunpack.c.l.b16 %v44
    %v115 = vunpack.c.l.b16 %v45
    %v116 = vunpack.c.l.b16 %v46
    %v117 = vunpack.c.l.b16 %v47
    %v118 = vunpack.c.l.b16 %v48
    %v119 = vunpack.c.l.b16 %v49
    %v120 = vunpack.c.l.b16 %v50
    %v121 = vunpack.c.l.b16 %v51
    %v122 = vunpack.c.l.b16 %v52
    %v123 = vunpack.c.l.b16 %v53
    %v124 = vunpack.c.l.b16 %v54
    %v125 = vunpack.c.l.b16 %v55
    %v126 = vunpack.c.l.b16 %v56
    %v127 = vunpack.c.l.b16 %v57
    %v128 = vunpack.c.l.b16 %v58
    %v129 = vunpack.c.l.b16 %v59
    %v130 = vunpack.c.l.b16 %v60
    %v131 = vunpack.c.l.b16 %v61
    %v132 = vpack.c.b16 %v108, %v107
    %v133 = vpack.c.b16 %v110, %v109
    %v134 = vpack.c.b16 %v112, %v111
    %v135 = vpack.c.b16 %v114, %v113
    %v136 = vpack.c.b16 %v116, %v115
    %v137 = vpack.c.b16 %v118, %v117
    %v138 = vpack.c.b16 %v120, %v119
    %v139 = vpack.c.b16 %v122, %v121
    %v140 = vpack.c.b16 %v124, %v123
    %v141 = vpack.c.b16 %v126, %v125
    %v142 = vpack.c.b16 %v128, %v127
    %v143 = vpack.c.b16 %v130, %v129
    %v144 = vpack.c.b16 %v131, %v131
    %v174 = vunpack.c.l.b16 %v62
    %v175 = vunpack.c.l.b16 %v63
    %v176 = vunpack.c.l.b16 %v64
    %v177 = vunpack.c.l.b16 %v65
    %v178 = vunpack.c.l.b16 %v66
    %v179 = vunpack.c.l.b16 %v67
    %v180 = vunpack.c.l.b16 %v68
    %v181 = vunpack.c.l.b16 %v69
    %v182 = vunpack.c.l.b16 %v70
    %v183 = vunpack.c.l.b16 %v71
    %v184 = vunpack.c.l.b16 %v72
    %v185 = vunpack.c.l.b16 %v73
    %v186 = vunpack.c.l.b16 %v74
    %v187 = vunpack.c.l.b16 %v75
    %v188 = vunpack.c.l.b16 %v76
    %v189 = vunpack.c.l.b16 %v77
    %v190 = vpack.c.b16 %v175, %v174
    %v191 = vpack.c.b16 %v177, %v176
    %v192 = vpack.c.b16 %v179, %v178
    %v193 = vpack.c.b16 %v181, %v180
    %v194 = vpack.c.b16 %v183, %v182
    %v195 = vpack.c.b16 %v185, %v184
    %v196 = vpack.c.b16 %v187, %v186
    %v197 = vpack.c.b16 %v189, %v188
    %206 = vmatpush.bf16.msra.mxu0 %v197
    %207 = vmatpush.bf16.msra.mxu0 %v196
    %208 = vmatpush.bf16.msra.mxu0 %v195
    %209 = vmatpush.bf16.msra.mxu0 %v194
    %210 = vmatpush.bf16.msra.mxu0 %v193
    %211 = vmatpush.bf16.msra.mxu0 %v192
    %212 = vmatpush.bf16.msra.mxu0 %v191
    %213 = vmatpush.bf16.msra.mxu0 %v190
    %214 = vmatmul.bf16.gmra.mxu0 %v132
    %v215 = vpop.f32.mrf.mxu0
    %v216 = vadd.f32 %v80, %v215
    %v217 = vpop.f32.mrf.mxu0
    %v218 = vadd.f32 %v80, %v217
    %219 = vmatmul.bf16.gmra.mxu0 %v133
    %v220 = vpop.f32.mrf.mxu0
    %v221 = vadd.f32 %v80, %v220
    %v222 = vpop.f32.mrf.mxu0
    %v223 = vadd.f32 %v80, %v222
    %224 = vmatmul.bf16.gmra.mxu0 %v134
    %v225 = vpop.f32.mrf.mxu0
    %v226 = vadd.f32 %v80, %v225
    %v227 = vpop.f32.mrf.mxu0
    %v228 = vadd.f32 %v80, %v227
    %229 = vmatmul.bf16.gmra.mxu0 %v135
    %v230 = vpop.f32.mrf.mxu0
    %v231 = vadd.f32 %v80, %v230
    %v232 = vpop.f32.mrf.mxu0
    %v233 = vadd.f32 %v80, %v232
    %234 = vmatmul.bf16.gmra.mxu0 %v136
    %v235 = vpop.f32.mrf.mxu0
    %v236 = vadd.f32 %v80, %v235
    %v237 = vpop.f32.mrf.mxu0
    %v238 = vadd.f32 %v80, %v237
    %239 = vmatmul.bf16.gmra.mxu0 %v137
    %v240 = vpop.f32.mrf.mxu0
    %v241 = vadd.f32 %v80, %v240
    %v242 = vpop.f32.mrf.mxu0
    %v243 = vadd.f32 %v80, %v242
    %244 = vmatmul.bf16.gmra.mxu0 %v138
    %v245 = vpop.f32.mrf.mxu0
    %v246 = vadd.f32 %v80, %v245
    %v247 = vpop.f32.mrf.mxu0
    %v248 = vadd.f32 %v80, %v247
    %249 = vmatmul.bf16.gmra.mxu0 %v139
    %v250 = vpop.f32.mrf.mxu0
    %v251 = vadd.f32 %v80, %v250
    %v252 = vpop.f32.mrf.mxu0
    %v253 = vadd.f32 %v80, %v252
    %254 = vmatmul.bf16.gmra.mxu0 %v140
    %v255 = vpop.f32.mrf.mxu0
    %v256 = vadd.f32 %v80, %v255
    %v257 = vpop.f32.mrf.mxu0
    %v258 = vadd.f32 %v80, %v257
    %259 = vmatmul.bf16.gmra.mxu0 %v141
    %v260 = vpop.f32.mrf.mxu0
    %v261 = vadd.f32 %v80, %v260
    %v262 = vpop.f32.mrf.mxu0
    %v263 = vadd.f32 %v80, %v262
    %264 = vmatmul.bf16.gmra.mxu0 %v142
    %v265 = vpop.f32.mrf.mxu0
    %v266 = vadd.f32 %v80, %v265
    %v267 = vpop.f32.mrf.mxu0
    %v268 = vadd.f32 %v80, %v267
    %269 = vmatmul.bf16.gmra.mxu0 %v143
    %v270 = vpop.f32.mrf.mxu0
    %v271 = vadd.f32 %v80, %v270
    %v272 = vpop.f32.mrf.mxu0
    %v273 = vadd.f32 %v80, %v272
    %274 = vmatmul.bf16.gmra.mxu0 %v144
    %v275 = vpop.f32.mrf.mxu0
    %v276 = vadd.f32 %v80, %v275
    %v277 = vpop.f32.mrf.mxu0
    %278 = vdwg.mxu0
    %v279 = vmax.f32 %v216, 0.0
    %v280 = vmax.f32 %v218, 0.0
    %v281 = vmax.f32 %v221, 0.0
    %v282 = vmax.f32 %v223, 0.0
    %v283 = vmax.f32 %v226, 0.0
    %v284 = vmax.f32 %v228, 0.0
    %v285 = vmax.f32 %v231, 0.0
    %v286 = vmax.f32 %v233, 0.0
    %v287 = vmax.f32 %v236, 0.0
    %v288 = vmax.f32 %v238, 0.0
    %v289 = vmax.f32 %v241, 0.0
    %v290 = vmax.f32 %v243, 0.0
    %v291 = vmax.f32 %v246, 0.0
    %v292 = vmax.f32 %v248, 0.0
    %v293 = vmax.f32 %v251, 0.0
    %v294 = vmax.f32 %v253, 0.0
    %v295 = vmax.f32 %v256, 0.0
    %v296 = vmax.f32 %v258, 0.0
    %v297 = vmax.f32 %v261, 0.0
    %v298 = vmax.f32 %v263, 0.0
    %v299 = vmax.f32 %v266, 0.0
    %v300 = vmax.f32 %v268, 0.0
    %v301 = vmax.f32 %v271, 0.0
    %v302 = vmax.f32 %v273, 0.0
    %v303 = vmax.f32 %v276, 0.0
    %v304 = vpack.c.bf16 %v280, %v279
    %v305 = vpack.c.bf16 %v282, %v281
    %v306 = vpack.c.bf16 %v284, %v283
    %v307 = vpack.c.bf16 %v286, %v285
    %v308 = vpack.c.bf16 %v288, %v287
    %v309 = vpack.c.bf16 %v290, %v289
    %v310 = vpack.c.bf16 %v292, %v291
    %v311 = vpack.c.bf16 %v294, %v293
    %v312 = vpack.c.bf16 %v296, %v295
    %v313 = vpack.c.bf16 %v298, %v297
    %v314 = vpack.c.bf16 %v300, %v299
    %v315 = vpack.c.bf16 %v302, %v301
    %v316 = vpack.c.bf16 %v303, %v303
    %v317 = vld [vmem:[%s3] sm:$0xf]
    %v318 = vld [vmem:[%s3 + $0x4] sm:$0xf]
    %v319 = vld [vmem:[%s3 + $0x8] sm:$0xf]
    %v320 = vld [vmem:[%s3 + $0xc] sm:$0xf]
    %v321 = vld [vmem:[%s3 + $0x10] sm:$0xf]
    %v322 = vld [vmem:[%s3 + $0x14] sm:$0xf]
    %v323 = vld [vmem:[%s3 + $0x18] sm:$0xf]
    %v324 = vld [vmem:[%s3 + $0x1c] sm:$0xf]
    %v325 = vld [vmem:[%s4] sm:$0x1]
    %v327 = vperm.slane %v325, 0
    %v337 = vunpack.c.l.b16 %v317
    %v338 = vunpack.c.l.b16 %v318
    %v339 = vunpack.c.l.b16 %v319
    %v340 = vunpack.c.l.b16 %v320
    %v341 = vunpack.c.l.b16 %v321
    %v342 = vunpack.c.l.b16 %v322
    %v343 = vunpack.c.l.b16 %v323
    %v344 = vunpack.c.l.b16 %v324
    %v345 = vpack.c.b16 %v338, %v337
    %v346 = vpack.c.b16 %v340, %v339
    %v347 = vpack.c.b16 %v342, %v341
    %v348 = vpack.c.b16 %v344, %v343
    %vm353 = vcmask 523264
    %v355 = vsel %vm353, %v304, 0
    %v358 = vsel %vm353, %v305, 0
    %v361 = vsel %vm353, %v306, 0
    %v364 = vsel %vm353, %v307, 0
    %v367 = vsel %vm353, %v308, 0
    %v370 = vsel %vm353, %v309, 0
    %v373 = vsel %vm353, %v310, 0
    %v376 = vsel %vm353, %v311, 0
    %v379 = vsel %vm353, %v312, 0
    %v382 = vsel %vm353, %v313, 0
    %v385 = vsel %vm353, %v314, 0
    %v388 = vsel %vm353, %v315, 0
    %v391 = vsel %vm353, %v316, 0
    %393 = vmatpush.bf16.msra.mxu0 0
    %394 = vmatpush.bf16.msra.mxu0 0
    %395 = vmatpush.bf16.msra.mxu0 0
    %396 = vmatpush.bf16.msra.mxu0 0
    %397 = vmatpush.bf16.msra.mxu0 %v348
    %398 = vmatpush.bf16.msra.mxu0 %v347
    %399 = vmatpush.bf16.msra.mxu0 %v346
    %400 = vmatpush.bf16.msra.mxu0 %v345
    %401 = vmatmul.bf16.gmra.mxu0 %v355
    %v402 = vpop.f32.mrf.mxu0
    %v403 = vadd.f32 %v327, %v402
    %v404 = vpop.f32.mrf.mxu0
    %v405 = vadd.f32 %v327, %v404
    %406 = vmatmul.bf16.gmra.mxu0 %v358
    %v407 = vpop.f32.mrf.mxu0
    %v408 = vadd.f32 %v327, %v407
    %v409 = vpop.f32.mrf.mxu0
    %v410 = vadd.f32 %v327, %v409
    %411 = vmatmul.bf16.gmra.mxu0 %v361
    %v412 = vpop.f32.mrf.mxu0
    %v413 = vadd.f32 %v327, %v412
    %v414 = vpop.f32.mrf.mxu0
    %v415 = vadd.f32 %v327, %v414
    %416 = vmatmul.bf16.gmra.mxu0 %v364
    %v417 = vpop.f32.mrf.mxu0
    %v418 = vadd.f32 %v327, %v417
    %v419 = vpop.f32.mrf.mxu0
    %v420 = vadd.f32 %v327, %v419
    %421 = vmatmul.bf16.gmra.mxu0 %v367
    %v422 = vpop.f32.mrf.mxu0
    %v423 = vadd.f32 %v327, %v422
    %v424 = vpop.f32.mrf.mxu0
    %v425 = vadd.f32 %v327, %v424
    %426 = vmatmul.bf16.gmra.mxu0 %v370
    %v427 = vpop.f32.mrf.mxu0
    %v428 = vadd.f32 %v327, %v427
    %v429 = vpop.f32.mrf.mxu0
    %v430 = vadd.f32 %v327, %v429
    %431 = vmatmul.bf16.gmra.mxu0 %v373
    %v432 = vpop.f32.mrf.mxu0
    %v433 = vadd.f32 %v327, %v432
    %v434 = vpop.f32.mrf.mxu0
    %v435 = vadd.f32 %v327, %v434
    %436 = vmatmul.bf16.gmra.mxu0 %v376
    %v437 = vpop.f32.mrf.mxu0
    %v438 = vadd.f32 %v327, %v437
    %v439 = vpop.f32.mrf.mxu0
    %v440 = vadd.f32 %v327, %v439
    %441 = vmatmul.bf16.gmra.mxu0 %v379
    %v442 = vpop.f32.mrf.mxu0
    %v443 = vadd.f32 %v327, %v442
    %v444 = vpop.f32.mrf.mxu0
    %v445 = vadd.f32 %v327, %v444
    %446 = vmatmul.bf16.gmra.mxu0 %v382
    %v447 = vpop.f32.mrf.mxu0
    %v448 = vadd.f32 %v327, %v447
    %v449 = vpop.f32.mrf.mxu0
    %v450 = vadd.f32 %v327, %v449
    %451 = vmatmul.bf16.gmra.mxu0 %v385
    %v452 = vpop.f32.mrf.mxu0
    %v453 = vadd.f32 %v327, %v452
    %v454 = vpop.f32.mrf.mxu0
    %v455 = vadd.f32 %v327, %v454
    %456 = vmatmul.bf16.gmra.mxu0 %v388
    %v457 = vpop.f32.mrf.mxu0
    %v458 = vadd.f32 %v327, %v457
    %v459 = vpop.f32.mrf.mxu0
    %v460 = vadd.f32 %v327, %v459
    %461 = vmatmul.bf16.gmra.mxu0 %v391
    %v462 = vpop.f32.mrf.mxu0
    %v463 = vadd.f32 %v327, %v462
    %v464 = vpop.f32.mrf.mxu0
    %465 = vdwg.mxu0
    %466 = vst [vmem:[#allocation2] sm:$0xff] %v403
    %467 = vst [vmem:[#allocation2 + $0x8] sm:$0xff] %v405
    %468 = vst [vmem:[#allocation2 + $0x10] sm:$0xff] %v408
    %469 = vst [vmem:[#allocation2 + $0x18] sm:$0xff] %v410
    %470 = vst [vmem:[#allocation2 + $0x20] sm:$0xff] %v413
    %471 = vst [vmem:[#allocation2 + $0x28] sm:$0xff] %v415
    %472 = vst [vmem:[#allocation2 + $0x30] sm:$0xff] %v418
    %473 = vst [vmem:[#allocation2 + $0x38] sm:$0xff] %v420
    %474 = vst [vmem:[#allocation2 + $0x40] sm:$0xff] %v423
    %475 = vst [vmem:[#allocation2 + $0x48] sm:$0xff] %v425
    %476 = vst [vmem:[#allocation2 + $0x50] sm:$0xff] %v428
    %477 = vst [vmem:[#allocation2 + $0x58] sm:$0xff] %v430
    %478 = vst [vmem:[#allocation2 + $0x60] sm:$0xff] %v433
    %479 = vst [vmem:[#allocation2 + $0x68] sm:$0xff] %v435
    %480 = vst [vmem:[#allocation2 + $0x70] sm:$0xff] %v438
    %481 = vst [vmem:[#allocation2 + $0x78] sm:$0xff] %v440
    %482 = vst [vmem:[#allocation2 + $0x80] sm:$0xff] %v443
    %483 = vst [vmem:[#allocation2 + $0x88] sm:$0xff] %v445
    %484 = vst [vmem:[#allocation2 + $0x90] sm:$0xff] %v448
    %485 = vst [vmem:[#allocation2 + $0x98] sm:$0xff] %v450
    %486 = vst [vmem:[#allocation2 + $0xa0] sm:$0xff] %v453
    %487 = vst [vmem:[#allocation2 + $0xa8] sm:$0xff] %v455
    %488 = vst [vmem:[#allocation2 + $0xb0] sm:$0xff] %v458
    %489 = vst [vmem:[#allocation2 + $0xb8] sm:$0xff] %v460
    %490 = vst [vmem:[#allocation2 + $0xc0] sm:$0xff] %v463
    %v491 = vpack.c.bf16 %v405, %v403
    %v492 = vpack.c.bf16 %v410, %v408
    %v493 = vpack.c.bf16 %v415, %v413
    %v494 = vpack.c.bf16 %v420, %v418
    %v495 = vpack.c.bf16 %v425, %v423
    %v496 = vpack.c.bf16 %v430, %v428
    %v497 = vpack.c.bf16 %v435, %v433
    %v498 = vpack.c.bf16 %v440, %v438
    %v499 = vpack.c.bf16 %v445, %v443
    %v500 = vpack.c.bf16 %v450, %v448
    %v501 = vpack.c.bf16 %v455, %v453
    %v502 = vpack.c.bf16 %v460, %v458
    %v503 = vpack.c.bf16 %v463, %v463
    %v504 = vld [vmem:[%s5] sm:$0xf]
    %v505 = vld [vmem:[%s5 + $0x4] sm:$0xf]
    %v506 = vld [vmem:[%s5 + $0x8] sm:$0xf]
    %v507 = vld [vmem:[%s5 + $0xc] sm:$0xf]
    %v508 = vld [vmem:[%s5 + $0x10] sm:$0xf]
    %v509 = vld [vmem:[%s5 + $0x14] sm:$0xf]
    %v510 = vld [vmem:[%s5 + $0x18] sm:$0xf]
    %v511 = vld [vmem:[%s5 + $0x1c] sm:$0xf]
    %v512 = vld [vmem:[%s5 + $0x20] sm:$0xf]
    %v513 = vld [vmem:[%s5 + $0x24] sm:$0xf]
    %v514 = vld [vmem:[%s5 + $0x28] sm:$0xf]
    %v515 = vld [vmem:[%s5 + $0x2c] sm:$0xf]
    %v516 = vld [vmem:[%s5 + $0x30] sm:$0xf]
    %v517 = vld [vmem:[%s5 + $0x34] sm:$0xf]
    %v518 = vld [vmem:[%s5 + $0x38] sm:$0xf]
    %v519 = vld [vmem:[%s5 + $0x3c] sm:$0xf]
    %v520 = vld [vmem:[%s6] sm:$0x1]
    %v522 = vperm.slane %v520, 0
    %v540 = vunpack.c.l.b16 %v504
    %v541 = vunpack.c.l.b16 %v505
    %v542 = vunpack.c.l.b16 %v506
    %v543 = vunpack.c.l.b16 %v507
    %v544 = vunpack.c.l.b16 %v508
    %v545 = vunpack.c.l.b16 %v509
    %v546 = vunpack.c.l.b16 %v510
    %v547 = vunpack.c.l.b16 %v511
    %v548 = vunpack.c.l.b16 %v512
    %v549 = vunpack.c.l.b16 %v513
    %v550 = vunpack.c.l.b16 %v514
    %v551 = vunpack.c.l.b16 %v515
    %v552 = vunpack.c.l.b16 %v516
    %v553 = vunpack.c.l.b16 %v517
    %v554 = vunpack.c.l.b16 %v518
    %v555 = vunpack.c.l.b16 %v519
    %v556 = vpack.c.b16 %v541, %v540
    %v557 = vpack.c.b16 %v543, %v542
    %v558 = vpack.c.b16 %v545, %v544
    %v559 = vpack.c.b16 %v547, %v546
    %v560 = vpack.c.b16 %v549, %v548
    %v561 = vpack.c.b16 %v551, %v550
    %v562 = vpack.c.b16 %v553, %v552
    %v563 = vpack.c.b16 %v555, %v554
    %572 = vmatpush.bf16.msra.mxu0 %v563
    %573 = vmatpush.bf16.msra.mxu0 %v562
    %574 = vmatpush.bf16.msra.mxu0 %v561
    %575 = vmatpush.bf16.msra.mxu0 %v560
    %576 = vmatpush.bf16.msra.mxu0 %v559
    %577 = vmatpush.bf16.msra.mxu0 %v558
    %578 = vmatpush.bf16.msra.mxu0 %v557
    %579 = vmatpush.bf16.msra.mxu0 %v556
    %580 = vmatmul.bf16.gmra.mxu0 %v491
    %v581 = vpop.f32.mrf.mxu0
    %v582 = vadd.f32 %v522, %v581
    %v583 = vpop.f32.mrf.mxu0
    %v584 = vadd.f32 %v522, %v583
    %585 = vmatmul.bf16.gmra.mxu0 %v492
    %v586 = vpop.f32.mrf.mxu0
    %v587 = vadd.f32 %v522, %v586
    %v588 = vpop.f32.mrf.mxu0
    %v589 = vadd.f32 %v522, %v588
    %590 = vmatmul.bf16.gmra.mxu0 %v493
    %v591 = vpop.f32.mrf.mxu0
    %v592 = vadd.f32 %v522, %v591
    %v593 = vpop.f32.mrf.mxu0
    %v594 = vadd.f32 %v522, %v593
    %595 = vmatmul.bf16.gmra.mxu0 %v494
    %v596 = vpop.f32.mrf.mxu0
    %v597 = vadd.f32 %v522, %v596
    %v598 = vpop.f32.mrf.mxu0
    %v599 = vadd.f32 %v522, %v598
    %600 = vmatmul.bf16.gmra.mxu0 %v495
    %v601 = vpop.f32.mrf.mxu0
    %v602 = vadd.f32 %v522, %v601
    %v603 = vpop.f32.mrf.mxu0
    %v604 = vadd.f32 %v522, %v603
    %605 = vmatmul.bf16.gmra.mxu0 %v496
    %v606 = vpop.f32.mrf.mxu0
    %v607 = vadd.f32 %v522, %v606
    %v608 = vpop.f32.mrf.mxu0
    %v609 = vadd.f32 %v522, %v608
    %610 = vmatmul.bf16.gmra.mxu0 %v497
    %v611 = vpop.f32.mrf.mxu0
    %v612 = vadd.f32 %v522, %v611
    %v613 = vpop.f32.mrf.mxu0
    %v614 = vadd.f32 %v522, %v613
    %615 = vmatmul.bf16.gmra.mxu0 %v498
    %v616 = vpop.f32.mrf.mxu0
    %v617 = vadd.f32 %v522, %v616
    %v618 = vpop.f32.mrf.mxu0
    %v619 = vadd.f32 %v522, %v618
    %620 = vmatmul.bf16.gmra.mxu0 %v499
    %v621 = vpop.f32.mrf.mxu0
    %v622 = vadd.f32 %v522, %v621
    %v623 = vpop.f32.mrf.mxu0
    %v624 = vadd.f32 %v522, %v623
    %625 = vmatmul.bf16.gmra.mxu0 %v500
    %v626 = vpop.f32.mrf.mxu0
    %v627 = vadd.f32 %v522, %v626
    %v628 = vpop.f32.mrf.mxu0
    %v629 = vadd.f32 %v522, %v628
    %630 = vmatmul.bf16.gmra.mxu0 %v501
    %v631 = vpop.f32.mrf.mxu0
    %v632 = vadd.f32 %v522, %v631
    %v633 = vpop.f32.mrf.mxu0
    %v634 = vadd.f32 %v522, %v633
    %635 = vmatmul.bf16.gmra.mxu0 %v502
    %v636 = vpop.f32.mrf.mxu0
    %v637 = vadd.f32 %v522, %v636
    %v638 = vpop.f32.mrf.mxu0
    %v639 = vadd.f32 %v522, %v638
    %640 = vmatmul.bf16.gmra.mxu0 %v503
    %v641 = vpop.f32.mrf.mxu0
    %v642 = vadd.f32 %v522, %v641
    %v643 = vpop.f32.mrf.mxu0
    %644 = vdwg.mxu0
    %v645 = vmax.f32 %v582, 0.0
    %v646 = vmax.f32 %v584, 0.0
    %v647 = vmax.f32 %v587, 0.0
    %v648 = vmax.f32 %v589, 0.0
    %v649 = vmax.f32 %v592, 0.0
    %v650 = vmax.f32 %v594, 0.0
    %v651 = vmax.f32 %v597, 0.0
    %v652 = vmax.f32 %v599, 0.0
    %v653 = vmax.f32 %v602, 0.0
    %v654 = vmax.f32 %v604, 0.0
    %v655 = vmax.f32 %v607, 0.0
    %v656 = vmax.f32 %v609, 0.0
    %v657 = vmax.f32 %v612, 0.0
    %v658 = vmax.f32 %v614, 0.0
    %v659 = vmax.f32 %v617, 0.0
    %v660 = vmax.f32 %v619, 0.0
    %v661 = vmax.f32 %v622, 0.0
    %v662 = vmax.f32 %v624, 0.0
    %v663 = vmax.f32 %v627, 0.0
    %v664 = vmax.f32 %v629, 0.0
    %v665 = vmax.f32 %v632, 0.0
    %v666 = vmax.f32 %v634, 0.0
    %v667 = vmax.f32 %v637, 0.0
    %v668 = vmax.f32 %v639, 0.0
    %v669 = vmax.f32 %v642, 0.0
    %v670 = vpack.c.bf16 %v646, %v645
    %v671 = vpack.c.bf16 %v648, %v647
    %v672 = vpack.c.bf16 %v650, %v649
    %v673 = vpack.c.bf16 %v652, %v651
    %v674 = vpack.c.bf16 %v654, %v653
    %v675 = vpack.c.bf16 %v656, %v655
    %v676 = vpack.c.bf16 %v658, %v657
    %v677 = vpack.c.bf16 %v660, %v659
    %v678 = vpack.c.bf16 %v662, %v661
    %v679 = vpack.c.bf16 %v664, %v663
    %v680 = vpack.c.bf16 %v666, %v665
    %v681 = vpack.c.bf16 %v668, %v667
    %v682 = vpack.c.bf16 %v669, %v669
    %v683 = vld [vmem:[%s7] sm:$0xf]
    %v684 = vld [vmem:[%s7 + $0x4] sm:$0xf]
    %v685 = vld [vmem:[%s7 + $0x8] sm:$0xf]
    %v686 = vld [vmem:[%s7 + $0xc] sm:$0xf]
    %v687 = vld [vmem:[%s7 + $0x10] sm:$0xf]
    %v688 = vld [vmem:[%s7 + $0x14] sm:$0xf]
    %v689 = vld [vmem:[%s7 + $0x18] sm:$0xf]
    %v690 = vld [vmem:[%s7 + $0x1c] sm:$0xf]
    %v691 = vld [vmem:[%s8] sm:$0x1]
    %v693 = vperm.slane %v691, 0
    %v703 = vunpack.c.l.b16 %v683
    %v704 = vunpack.c.l.b16 %v684
    %v705 = vunpack.c.l.b16 %v685
    %v706 = vunpack.c.l.b16 %v686
    %v707 = vunpack.c.l.b16 %v687
    %v708 = vunpack.c.l.b16 %v688
    %v709 = vunpack.c.l.b16 %v689
    %v710 = vunpack.c.l.b16 %v690
    %v711 = vpack.c.b16 %v704, %v703
    %v712 = vpack.c.b16 %v706, %v705
    %v713 = vpack.c.b16 %v708, %v707
    %v714 = vpack.c.b16 %v710, %v709
    %v720 = vsel %vm353, %v670, 0
    %v723 = vsel %vm353, %v671, 0
    %v726 = vsel %vm353, %v672, 0
    %v729 = vsel %vm353, %v673, 0
    %v732 = vsel %vm353, %v674, 0
    %v735 = vsel %vm353, %v675, 0
    %v738 = vsel %vm353, %v676, 0
    %v741 = vsel %vm353, %v677, 0
    %v744 = vsel %vm353, %v678, 0
    %v747 = vsel %vm353, %v679, 0
    %v750 = vsel %vm353, %v680, 0
    %v753 = vsel %vm353, %v681, 0
    %v756 = vsel %vm353, %v682, 0
    %758 = vmatpush.bf16.msra.mxu0 0
    %759 = vmatpush.bf16.msra.mxu0 0
    %760 = vmatpush.bf16.msra.mxu0 0
    %761 = vmatpush.bf16.msra.mxu0 0
    %762 = vmatpush.bf16.msra.mxu0 %v714
    %763 = vmatpush.bf16.msra.mxu0 %v713
    %764 = vmatpush.bf16.msra.mxu0 %v712
    %765 = vmatpush.bf16.msra.mxu0 %v711
    %766 = vmatmul.bf16.gmra.mxu0 %v720
    %v767 = vpop.f32.mrf.mxu0
    %v768 = vadd.f32 %v693, %v767
    %v769 = vpop.f32.mrf.mxu0
    %v770 = vadd.f32 %v693, %v769
    %771 = vmatmul.bf16.gmra.mxu0 %v723
    %v772 = vpop.f32.mrf.mxu0
    %v773 = vadd.f32 %v693, %v772
    %v774 = vpop.f32.mrf.mxu0
    %v775 = vadd.f32 %v693, %v774
    %776 = vmatmul.bf16.gmra.mxu0 %v726
    %v777 = vpop.f32.mrf.mxu0
    %v778 = vadd.f32 %v693, %v777
    %v779 = vpop.f32.mrf.mxu0
    %v780 = vadd.f32 %v693, %v779
    %781 = vmatmul.bf16.gmra.mxu0 %v729
    %v782 = vpop.f32.mrf.mxu0
    %v783 = vadd.f32 %v693, %v782
    %v784 = vpop.f32.mrf.mxu0
    %v785 = vadd.f32 %v693, %v784
    %786 = vmatmul.bf16.gmra.mxu0 %v732
    %v787 = vpop.f32.mrf.mxu0
    %v788 = vadd.f32 %v693, %v787
    %v789 = vpop.f32.mrf.mxu0
    %v790 = vadd.f32 %v693, %v789
    %791 = vmatmul.bf16.gmra.mxu0 %v735
    %v792 = vpop.f32.mrf.mxu0
    %v793 = vadd.f32 %v693, %v792
    %v794 = vpop.f32.mrf.mxu0
    %v795 = vadd.f32 %v693, %v794
    %796 = vmatmul.bf16.gmra.mxu0 %v738
    %v797 = vpop.f32.mrf.mxu0
    %v798 = vadd.f32 %v693, %v797
    %v799 = vpop.f32.mrf.mxu0
    %v800 = vadd.f32 %v693, %v799
    %801 = vmatmul.bf16.gmra.mxu0 %v741
    %v802 = vpop.f32.mrf.mxu0
    %v803 = vadd.f32 %v693, %v802
    %v804 = vpop.f32.mrf.mxu0
    %v805 = vadd.f32 %v693, %v804
    %806 = vmatmul.bf16.gmra.mxu0 %v744
    %v807 = vpop.f32.mrf.mxu0
    %v808 = vadd.f32 %v693, %v807
    %v809 = vpop.f32.mrf.mxu0
    %v810 = vadd.f32 %v693, %v809
    %811 = vmatmul.bf16.gmra.mxu0 %v747
    %v812 = vpop.f32.mrf.mxu0
    %v813 = vadd.f32 %v693, %v812
    %v814 = vpop.f32.mrf.mxu0
    %v815 = vadd.f32 %v693, %v814
    %816 = vmatmul.bf16.gmra.mxu0 %v750
    %v817 = vpop.f32.mrf.mxu0
    %v818 = vadd.f32 %v693, %v817
    %v819 = vpop.f32.mrf.mxu0
    %v820 = vadd.f32 %v693, %v819
    %821 = vmatmul.bf16.gmra.mxu0 %v753
    %v822 = vpop.f32.mrf.mxu0
    %v823 = vadd.f32 %v693, %v822
    %v824 = vpop.f32.mrf.mxu0
    %v825 = vadd.f32 %v693, %v824
    %826 = vmatmul.bf16.gmra.mxu0 %v756
    %v827 = vpop.f32.mrf.mxu0
    %v828 = vadd.f32 %v693, %v827
    %v829 = vpop.f32.mrf.mxu0
    %830 = vdwg.mxu0
    %831 = vst [vmem:[#allocation4] sm:$0xff] %v768
    %832 = vst [vmem:[#allocation4 + $0x8] sm:$0xff] %v770
    %833 = vst [vmem:[#allocation4 + $0x10] sm:$0xff] %v773
    %834 = vst [vmem:[#allocation4 + $0x18] sm:$0xff] %v775
    %835 = vst [vmem:[#allocation4 + $0x20] sm:$0xff] %v778
    %836 = vst [vmem:[#allocation4 + $0x28] sm:$0xff] %v780
    %837 = vst [vmem:[#allocation4 + $0x30] sm:$0xff] %v783
    %838 = vst [vmem:[#allocation4 + $0x38] sm:$0xff] %v785
    %839 = vst [vmem:[#allocation4 + $0x40] sm:$0xff] %v788
    %840 = vst [vmem:[#allocation4 + $0x48] sm:$0xff] %v790
    %841 = vst [vmem:[#allocation4 + $0x50] sm:$0xff] %v793
    %842 = vst [vmem:[#allocation4 + $0x58] sm:$0xff] %v795
    %843 = vst [vmem:[#allocation4 + $0x60] sm:$0xff] %v798
    %844 = vst [vmem:[#allocation4 + $0x68] sm:$0xff] %v800
    %845 = vst [vmem:[#allocation4 + $0x70] sm:$0xff] %v803
    %846 = vst [vmem:[#allocation4 + $0x78] sm:$0xff] %v805
    %847 = vst [vmem:[#allocation4 + $0x80] sm:$0xff] %v808
    %848 = vst [vmem:[#allocation4 + $0x88] sm:$0xff] %v810
    %849 = vst [vmem:[#allocation4 + $0x90] sm:$0xff] %v813
    %850 = vst [vmem:[#allocation4 + $0x98] sm:$0xff] %v815
    %851 = vst [vmem:[#allocation4 + $0xa0] sm:$0xff] %v818
    %852 = vst [vmem:[#allocation4 + $0xa8] sm:$0xff] %v820
    %853 = vst [vmem:[#allocation4 + $0xb0] sm:$0xff] %v823
    %854 = vst [vmem:[#allocation4 + $0xb8] sm:$0xff] %v825
    %855 = vst [vmem:[#allocation4 + $0xc0] sm:$0xff] %v828
    // Predicated region
    $region38: #{tpu_custom_call.1} parent=1 // pred_check
      _
    $region39: #{tpu_custom_call.1} parent=1 // pred_check_branch
      %857 = sbr.rel (0) target = $region41
    $region40: #{tpu_custom_call.1} parent=1 // pred_region
      %859 = vsyncadd [#allocation3], 0
      %s860 = sshll.u32 [#allocation2], 4
      %s861 = int_to_ptr.vmem [resolvable:$true] %s860
      %s862 = sshll.u32 %s9, 4
      %s863 = int_to_ptr.hbm [resolvable:$true] %s862
      %868 = dma.vmem_to_hbm [thread:$0]  %s861, 3200, %s863, [#allocation3], 128, 128, 8
    $region41: #{tpu_custom_call.1} parent=1 // pred_fallthru
      _
    // Predicated region
    $region42: #{tpu_custom_call.1} parent=1 // pred_check
      _
    $region43: #{tpu_custom_call.1} parent=1 // pred_check_branch
      %870 = sbr.rel (0) target = $region45
    $region44: #{tpu_custom_call.1} parent=1 // pred_region
      %872 = vsyncadd [#allocation5], 0
      %s873 = sshll.u32 [#allocation4], 4
      %s874 = int_to_ptr.vmem [resolvable:$true] %s873
      %s875 = sshll.u32 %s10, 4
      %s876 = int_to_ptr.hbm [resolvable:$true] %s875
      %881 = dma.vmem_to_hbm [thread:$0]  %s874, 3200, %s876, [#allocation5], 128, 128, 8
    $region45: #{tpu_custom_call.1} parent=1 // pred_fallthru
      _
    // Predicated region
    $region46: #{tpu_custom_call.1} parent=1 // pred_check
      _
    $region47: #{tpu_custom_call.1} parent=1 // pred_check_branch
      %883 = sbr.rel (0) target = $region49
    $region48: #{tpu_custom_call.1} parent=1 // pred_region
      %885 = dma.done [#allocation3], 3200
    $region49: #{tpu_custom_call.1} parent=1 // pred_fallthru
      _
    // Predicated region
    $region50: #{tpu_custom_call.1} parent=1 // pred_check
      _
    $region51: #{tpu_custom_call.1} parent=1 // pred_check_branch
      %887 = sbr.rel (0) target = $region53
    $region52: #{tpu_custom_call.1} parent=1 // pred_region
      %889 = dma.done [#allocation5], 3200
    $region53: #{tpu_custom_call.1} parent=1 // pred_fallthru
      _
    %890 = vsyncpa [#allocation3], 1
    %891 = vsyncpa [#allocation5], 1

</llo_original>
